<compile_context>
chip_gen: v7x
topology: tpu7x:2x2x1
jax: 0.10.0
libtpu: 0.0.40
codegen_flags: <defaults>
</compile_context>

<pallas_src>
import functools
import math

import jax
import jax.numpy as jnp
from jax import lax
from jax.experimental import pallas as pl
from jax.experimental.pallas import tpu as pltpu


def _round_up(x, m):
    return ((x + m - 1) // m) * m


def _l2_normalize_rows(x, eps=1e-12):
    # F.normalize(x, p=2, dim=1, eps) == x / max(||x||, eps) == x * rsqrt(max(ss, eps^2))
    ss = jnp.sum(x * x, axis=1, keepdims=True)
    return x * lax.rsqrt(jnp.maximum(ss, jnp.float32(eps * eps)))


def _vmem_limit_bytes():
    """Generation-aware scoped-VMEM limit (~112 MiB on v5e/v6e, ~56 MiB on v7x)."""
    cap = None
    try:
        info = pltpu.get_tpu_info()
        cap = getattr(info, "vmem_capacity_bytes", None)
    except Exception:
        cap = None
    if not cap:
        cap = 64 * 1024 * 1024          # conservative fallback (v7x per-TC VMEM)
    return min(int(cap) * 7 // 8, 112 * 1024 * 1024)


def _choose_tiles(n_base, d_pad, b_rows, vmem_limit):
    """Pick (n_pad, block_rows, block_k) for the Graph tiles.

    Resident path: the whole padded Graph is one block (constant block index =>
    DMA'd once, reused every layer).  Streamed path: (block_rows, block_k) tiles
    with a contraction grid axis; block_k is grown while the double-buffered tile
    still fits the VMEM budget.
    """
    budget = int(vmem_limit * 0.85)     # headroom for outputs / internal scratch

    def resident_bytes(n_pad):
        return (8 * n_pad * d_pad           # cur ping-pong (2x bf16) + acc (f32)
                + n_pad * d_pad * 4         # psum (block_rows == n_pad)
                + 2 * b_rows * d_pad * 4    # scoring gather scratch
                + 2 * n_pad * n_pad * 2)    # Graph, conservatively double-buffered

    if resident_bytes(n_base) <= budget:
        return n_base, n_base, n_base

    block_rows = 256 if n_base >= 256 else 128
    fixed = 8 * n_base * d_pad + block_rows * d_pad * 4 + 2 * b_rows * d_pad * 4
    avail = budget - fixed
    if avail <= 2 * block_rows * 128 * 2:
        raise ValueError("embedding tables do not fit VMEM; shard the node dimension")
    block_k = 128
    while block_k * 2 <= n_base and 2 * block_rows * (block_k * 2) * 2 <= avail:
        block_k *= 2
    n_pad = _round_up(n_base, max(block_rows, block_k))
    return n_pad, block_rows, block_k


def _pad_inputs(user_w, item_w, graph, n_pad, d_pad):
    """Concatenate + zero-pad tables, L2-normalize rows in the wrapper (plain XLA)."""
    U, D = user_w.shape
    I = item_w.shape[0]
    N = U + I
    emb = jnp.zeros((n_pad, d_pad), jnp.float32)
    emb = emb.at[:U, :D].set(user_w.astype(jnp.float32))
    emb = emb.at[U:N, :D].set(item_w.astype(jnp.float32))
    emb = _l2_normalize_rows(emb)                      # all-zero pad rows stay zero
    g = jnp.zeros((n_pad, n_pad), jnp.float32)
    g = g.at[:N, :N].set(graph.astype(jnp.float32))
    # bf16 Graph / bf16 current embedding: native MXU rate, halved HBM traffic;
    # accumulation stays f32 inside the kernel.
    return emb, emb.astype(jnp.bfloat16), g.astype(jnp.bfloat16)


# -----------------------------------------------------------------------------
# Fused kernel: seed -> n_layers of (tiled) Graph matmul -> mean -> score
# -----------------------------------------------------------------------------
def ddrm_kernel(users_sref, items_sref,              # scalar prefetch (SMEM int32[B])
                embf_hbm, embh_hbm, graph_ref,       # inputs (2x HBM refs, 1 VMEM tile)
                gamma_ref,                           # output (b_rows, 1) f32
                cur_even, cur_odd, acc_ref,          # resident VMEM scratch
                psum_ref, u_gth, i_gth,              # tile / scoring scratch
                *, n_layers, num_users, block_rows, block_k, batch):
    l = pl.program_id(0)        # layer axis (sequential)
    rb = pl.program_id(1)       # output row-block axis (sequential; shares scratch)
    kb = pl.program_id(2)       # contraction (Graph column) axis
    n_rb = pl.num_programs(1)
    n_kb = pl.num_programs(2)

    # ---- very first grid step: pull the pre-normalized table into scratch --------
    @pl.when(jnp.logical_and(l == 0, jnp.logical_and(rb == 0, kb == 0)))
    def _init():
        pltpu.sync_copy(embf_hbm, acc_ref)           # layer-0 term of the mean (f32)
        pltpu.sync_copy(embh_hbm, cur_even)          # layer-0 MXU operand (bf16)

    # ---- propagation: rows [rb*tm, rb*tm+tm) of layer l+1, K-tiled ----------------
    row0 = pl.multiple_of(rb * block_rows, block_rows)
    col0 = pl.multiple_of(kb * block_k, block_k)
    g_blk = graph_ref[...]                           # (block_rows, block_k) bf16

    def propagate(cur_ref, nxt_ref):
        @pl.when(kb == 0)
        def _():
            psum_ref[...] = jnp.zeros_like(psum_ref)

        psum_ref[...] += jnp.dot(g_blk, cur_ref[pl.ds(col0, block_k), :],
                                 preferred_element_type=jnp.float32)

        @pl.when(kb == n_kb - 1)
        def _commit():
            nxt = psum_ref[...]
            acc_ref[pl.ds(row0, block_rows), :] += nxt           # running layer sum
            nxt_ref[pl.ds(row0, block_rows), :] = nxt.astype(jnp.bfloat16)

    parity = l % 2

    @pl.when(parity == 0)
    def _even():
        propagate(cur_even, cur_odd)

    @pl.when(parity == 1)
    def _odd():
        propagate(cur_odd, cur_even)

    # ---- last grid step: fused gather + dot-product scoring ----------------------
    is_last = jnp.logical_and(
        l == pl.num_programs(0) - 1,
        jnp.logical_and(rb == n_rb - 1, kb == n_kb - 1))

    @pl.when(is_last)
    def _score():
        u_gth[...] = jnp.zeros_like(u_gth)
        i_gth[...] = jnp.zeros_like(i_gth)

        def gather(b, carry):
            u_idx = users_sref[b]
            i_idx = items_sref[b] + num_users
            u_gth[pl.ds(b, 1), :] = acc_ref[pl.ds(u_idx, 1), :]
            i_gth[pl.ds(b, 1), :] = acc_ref[pl.ds(i_idx, 1), :]
            return carry

        lax.fori_loop(0, batch, gather, 0)

        # light_out = acc / (n_layers+1): fold both means into the dot product scale.
        scale = jnp.float32(1.0 / float((n_layers + 1) ** 2))
        gamma_ref[...] = jnp.sum(u_gth[...] * i_gth[...], axis=1, keepdims=True) * scale


# -----------------------------------------------------------------------------
# Wrapper
# -----------------------------------------------------------------------------
def ddrm_forward(user_w, item_w, graph, users, items, n_layers):
    """Full DDRM.forward: returns gamma [B]."""
    if n_layers < 1:
        raise ValueError("n_layers must be >= 1")
    U, D = user_w.shape
    I = item_w.shape[0]
    N = U + I
    B = users.shape[0]

    d_pad = _round_up(D, 128)
    b_rows = _round_up(max(B, 1), 8)
    n_base = _round_up(N, 128)
    vmem_limit = _vmem_limit_bytes()
    n_pad, block_rows, block_k = _choose_tiles(n_base, d_pad, b_rows, vmem_limit)

    emb_f32, emb_bf16, g_bf16 = _pad_inputs(user_w, item_w, graph, n_pad, d_pad)
    n_rb = n_pad // block_rows
    n_kb = n_pad // block_k

    kernel = functools.partial(
        ddrm_kernel, n_layers=n_layers, num_users=U,
        block_rows=block_rows, block_k=block_k, batch=B)

    grid_spec = pltpu.PrefetchScalarGridSpec(
        num_scalar_prefetch=2,                        # users, items -> SMEM
        grid=(n_layers, n_rb, n_kb),
        in_specs=[
            pl.BlockSpec(memory_space=pl.ANY),        # normalized table, f32 (HBM)
            pl.BlockSpec(memory_space=pl.ANY),        # normalized table, bf16 (HBM)
            # Graph tile.  When (block_rows, block_k) == (n_pad, n_pad) the block
            # index is constant, so the whole Graph is DMA'd into VMEM once and
            # reused across every layer; otherwise it streams (auto double-buffered).
            pl.BlockSpec((block_rows, block_k), lambda l, rb, kb, u, i: (rb, kb)),
        ],
        out_specs=pl.BlockSpec((b_rows, 1), lambda l, rb, kb, u, i: (0, 0)),
        scratch_shapes=[
            pltpu.VMEM((n_pad, d_pad), jnp.bfloat16),       # cur (even layers, MXU op)
            pltpu.VMEM((n_pad, d_pad), jnp.bfloat16),       # cur (odd layers, MXU op)
            pltpu.VMEM((n_pad, d_pad), jnp.float32),        # running sum of layer embs
            pltpu.VMEM((block_rows, d_pad), jnp.float32),   # matmul partial sums
            pltpu.VMEM((b_rows, d_pad), jnp.float32),       # gathered user rows
            pltpu.VMEM((b_rows, d_pad), jnp.float32),       # gathered item rows
        ],
    )

    gamma2d = pl.pallas_call(
        kernel,
        out_shape=jax.ShapeDtypeStruct((b_rows, 1), jnp.float32),
        grid_spec=grid_spec,
        compiler_params=pltpu.CompilerParams(
            # All grid axes touch the resident cur/acc scratch, so they must stay
            # sequential; megacore-sharding any of them would split that state.
            dimension_semantics=("arbitrary", "arbitrary", "arbitrary"),
            vmem_limit_bytes=vmem_limit,
        ),
    )(users.astype(jnp.int32), items.astype(jnp.int32), emb_f32, emb_bf16, g_bf16)

    return gamma2d[:B, 0]


# -----------------------------------------------------------------------------
# References (plain JAX) for correctness checking
# -----------------------------------------------------------------------------
def reference_f32(user_w, item_w, graph, users, items, n_layers):
    """Exact PyTorch forward semantics in f32."""
    eps = 1e-12
    un = user_w / jnp.maximum(
        jnp.sqrt(jnp.sum(user_w * user_w, axis=1, keepdims=True)), eps)
    itn = item_w / jnp.maximum(
        jnp.sqrt(jnp.sum(item_w * item_w, axis=1, keepdims=True)), eps)
    emb = jnp.concatenate([un, itn], axis=0)
    acc, cur = emb, emb
    for _ in range(n_layers):
        cur = jnp.dot(graph, cur, precision=lax.Precision.HIGHEST)
        acc = acc + cur
    light = acc / (n_layers + 1)
    U = user_w.shape[0]
    return jnp.sum(light[:U][users] * light[U:][items], axis=1)


def reference_bf16(user_w, item_w, graph, users, items, n_layers):
    """Mirror of the kernel numerics (bf16 MXU operands, f32 accumulation)."""
    U, D = user_w.shape
    N = U + item_w.shape[0]
    d_pad = _round_up(D, 128)
    n_pad = _round_up(N, 128)
    emb_f32, emb_bf16, g16 = _pad_inputs(user_w, item_w, graph, n_pad, d_pad)
    acc = emb_f32
    cur16 = emb_bf16
    for _ in range(n_layers):
        nxt = jnp.dot(g16, cur16, preferred_element_type=jnp.float32)
        acc = acc + nxt
        cur16 = nxt.astype(jnp.bfloat16)
    light = acc / (n_layers + 1)
    return jnp.sum(light[users] * light[U + items], axis=1)


# -----------------------------------------------------------------------------
# Deterministic setup + run
# -----------------------------------------------------------------------------
def xavier_uniform(key, shape, gain):
    fan_out, fan_in = shape  # torch: fan_in = size(1), fan_out = size(0)
    bound = gain * math.sqrt(6.0 / (fan_in + fan_out))
    return jax.random.uniform(key, shape, jnp.float32, -bound, bound)


if __name__ == "__main__":
    num_users, num_items, hid_dim, n_layers = 24, 40, 32, 2
    N = num_users + num_items
    batch = 8

    key = jax.random.PRNGKey(0)
    k_u, k_i, k_g, k_idx_u, k_idx_i = jax.random.split(key, 5)

    # Embedding tables (xavier_uniform, gain=1.414, as in the module __init__).
    user_w = xavier_uniform(k_u, (num_users, hid_dim), gain=1.414)
    item_w = xavier_uniform(k_i, (num_items, hid_dim), gain=1.414)

    # Synthetic symmetric row-normalized adjacency standing in for self.Graph.
    adj = (jax.random.uniform(k_g, (N, N)) < 0.1).astype(jnp.float32)
    adj = jnp.maximum(adj, adj.T)
    deg = jnp.sum(adj, axis=1, keepdims=True)
    graph = adj / jnp.maximum(deg, 1.0)

    users = jax.random.randint(k_idx_u, (batch,), 0, num_users)
    items = jax.random.randint(k_idx_i, (batch,), 0, num_items)

    gamma = ddrm_forward(user_w, item_w, graph, users, items, n_layers)
    jax.block_until_ready(gamma)
    assert gamma.shape == (batch,)

    ref_exact = reference_bf16(user_w, item_w, graph, users, items, n_layers)
    ref_torch = reference_f32(user_w, item_w, graph, users, items, n_layers)
    assert jnp.allclose(gamma, ref_exact, atol=1e-3, rtol=1e-3), (gamma, ref_exact)
    assert jnp.allclose(gamma, ref_torch, atol=2e-2, rtol=2e-2), (gamma, ref_torch)

    print("KERNEL_OK")
</pallas_src>

<mosaic_0001>
module attributes {stable_mosaic.version = 11 : i64} {
  func.func @ddrm_kernel(%arg0: i32, %arg1: i32, %arg2: i32, %arg3: memref<8xi32, #tpu.memory_space<smem>>, %arg4: memref<8xi32, #tpu.memory_space<smem>>, %arg5: memref<128x128xf32, #tpu.memory_space<any>>, %arg6: memref<128x128xbf16, #tpu.memory_space<any>>, %arg7: memref<128x128xbf16, #tpu.memory_space<vmem>>, %arg8: memref<8x1xf32, #tpu.memory_space<vmem>>, %arg9: memref<128x128xbf16, #tpu.memory_space<vmem>>, %arg10: memref<128x128xbf16, #tpu.memory_space<vmem>>, %arg11: memref<128x128xf32, #tpu.memory_space<vmem>>, %arg12: memref<128x128xf32, #tpu.memory_space<vmem>>, %arg13: memref<8x128xf32, #tpu.memory_space<vmem>>, %arg14: memref<8x128xf32, #tpu.memory_space<vmem>>) attributes {dimension_semantics = [#tpu.dimension_semantics<arbitrary>, #tpu.dimension_semantics<arbitrary>, #tpu.dimension_semantics<arbitrary>], iteration_bounds = array<i64: 2, 1, 1>, scalar_prefetch = 2 : i64, scratch_operands = 6 : i64, tpu.core_type = #tpu.core_type<tc>, window_params = [{}, {}, {transform_indices = @transform_2, window_bounds = array<i64: 128, 128>}, {pipeline_mode = #tpu.pipeline_mode<synchronous>, transform_indices = @transform_3, window_bounds = array<i64: 8, 1>}]} {
    %c0_i32 = arith.constant 0 : i32
    %0 = arith.cmpi eq, %arg0, %c0_i32 : i32
    %c0_i32_0 = arith.constant 0 : i32
    %1 = arith.cmpi eq, %arg1, %c0_i32_0 : i32
    %c0_i32_1 = arith.constant 0 : i32
    %2 = arith.cmpi eq, %arg2, %c0_i32_1 : i32
    %3 = arith.andi %1, %2 : i1
    %4 = arith.andi %0, %3 : i1
    %5 = arith.extui %4 : i1 to i32
    %c0_i32_2 = arith.constant 0 : i32
    %6 = arith.cmpi ne, %5, %c0_i32_2 : i32
    scf.if %6 {
      "tpu.region"() ({
        %35 = tpu.sem_alloc : memref<!tpu.dma_semaphore, #tpu.memory_space<semaphore_mem>>
        tpu.enqueue_dma source(%arg5 : memref<128x128xf32, #tpu.memory_space<any>>) target(%arg11 : memref<128x128xf32, #tpu.memory_space<vmem>>) target_semaphore(%35 : memref<!tpu.dma_semaphore, #tpu.memory_space<semaphore_mem>>)
        tpu.wait_dma2 semaphore(%35 : memref<!tpu.dma_semaphore, #tpu.memory_space<semaphore_mem>>) src(%arg5 : memref<128x128xf32, #tpu.memory_space<any>>) dst(%arg11 : memref<128x128xf32, #tpu.memory_space<vmem>>)
        tpu.yield
      }) : () -> ()
      "tpu.region"() ({
        %35 = tpu.sem_alloc : memref<!tpu.dma_semaphore, #tpu.memory_space<semaphore_mem>>
        tpu.enqueue_dma source(%arg6 : memref<128x128xbf16, #tpu.memory_space<any>>) target(%arg9 : memref<128x128xbf16, #tpu.memory_space<vmem>>) target_semaphore(%35 : memref<!tpu.dma_semaphore, #tpu.memory_space<semaphore_mem>>)
        tpu.wait_dma2 semaphore(%35 : memref<!tpu.dma_semaphore, #tpu.memory_space<semaphore_mem>>) src(%arg6 : memref<128x128xbf16, #tpu.memory_space<any>>) dst(%arg9 : memref<128x128xbf16, #tpu.memory_space<vmem>>)
        tpu.yield
      }) : () -> ()
    } else {
    }
    %c128_i32 = arith.constant 128 : i32
    %7 = arith.muli %arg1, %c128_i32 : i32
    %8 = tpu.assume_multiple %7, 128 : i32
    %c128_i32_3 = arith.constant 128 : i32
    %9 = arith.muli %arg2, %c128_i32_3 : i32
    %10 = tpu.assume_multiple %9, 128 : i32
    %c0 = arith.constant 0 : index
    %c0_4 = arith.constant 0 : index
    %11 = vector.load %arg7[%c0, %c0_4] : memref<128x128xbf16, #tpu.memory_space<vmem>>, vector<128x128xbf16>
    %c2_i32 = arith.constant 2 : i32
    %c0_i32_5 = arith.constant 0 : i32
    %12 = arith.cmpi eq, %c2_i32, %c0_i32_5 : i32
    %c1_i32 = arith.constant 1 : i32
    %13 = arith.select %12, %c1_i32, %c2_i32 : i32
    %14 = arith.remsi %arg0, %13 : i32
    %c0_i32_6 = arith.constant 0 : i32
    %15 = arith.cmpi ne, %14, %c0_i32_6 : i32
    %c0_i32_7 = arith.constant 0 : i32
    %16 = arith.cmpi slt, %14, %c0_i32_7 : i32
    %c0_i32_8 = arith.constant 0 : i32
    %17 = arith.cmpi slt, %13, %c0_i32_8 : i32
    %18 = arith.xori %16, %17 : i1
    %19 = arith.andi %18, %15 : i1
    %20 = arith.addi %14, %13 : i32
    %21 = arith.select %19, %20, %14 : i32
    %c0_i32_9 = arith.constant 0 : i32
    %22 = arith.cmpi eq, %21, %c0_i32_9 : i32
    %23 = arith.extui %22 : i1 to i32
    %c0_i32_10 = arith.constant 0 : i32
    %24 = arith.cmpi ne, %23, %c0_i32_10 : i32
    scf.if %24 {
      %c0_i32_17 = arith.constant 0 : i32
      %35 = arith.cmpi eq, %arg2, %c0_i32_17 : i32
      %36 = arith.extui %35 : i1 to i32
      %c0_i32_18 = arith.constant 0 : i32
      %37 = arith.cmpi ne, %36, %c0_i32_18 : i32
      scf.if %37 {
        %cst_26 = arith.constant 0.000000e+00 : f32
        %47 = vector.broadcast %cst_26 : f32 to vector<128x128xf32>
        %c0_27 = arith.constant 0 : index
        %c0_28 = arith.constant 0 : index
        %48 = vector.load %arg12[%c0_27, %c0_28] : memref<128x128xf32, #tpu.memory_space<vmem>>, vector<128x128xf32>
        tpu.vector_store %arg12[%c0_27, %c0_28], %47 {strides = array<i32>} : memref<128x128xf32, #tpu.memory_space<vmem>>, vector<128x128xf32>,
      } else {
      }
      %c0_19 = arith.constant 0 : index
      %c0_20 = arith.constant 0 : index
      %38 = vector.load %arg12[%c0_19, %c0_20] : memref<128x128xf32, #tpu.memory_space<vmem>>, vector<128x128xf32>
      %39 = arith.index_cast %10 : i32 to index
      %c0_21 = arith.constant 0 : index
      %40 = vector.load %arg9[%39, %c0_21] : memref<128x128xbf16, #tpu.memory_space<vmem>>, vector<128x128xbf16>
      %cst = arith.constant dense<0.000000e+00> : vector<128x128xf32>
      %41 = tpu.matmul %11, %40, %cst {dimension_numbers = #tpu.dot_dimension_numbers<[1], [0], [0], [1], [0, 0, 1, 1], [], []>} : vector<128x128xbf16>, vector<128x128xbf16>, vector<128x128xf32> -> vector<128x128xf32>
      %42 = arith.addf %38, %41 : vector<128x128xf32>
      %c0_22 = arith.constant 0 : index
      %c0_23 = arith.constant 0 : index
      %43 = vector.load %arg12[%c0_22, %c0_23] : memref<128x128xf32, #tpu.memory_space<vmem>>, vector<128x128xf32>
      tpu.vector_store %arg12[%c0_22, %c0_23], %42 {strides = array<i32>} : memref<128x128xf32, #tpu.memory_space<vmem>>, vector<128x128xf32>,
      %c0_i32_24 = arith.constant 0 : i32
      %44 = arith.cmpi eq, %arg2, %c0_i32_24 : i32
      %45 = arith.extui %44 : i1 to i32
      %c0_i32_25 = arith.constant 0 : i32
      %46 = arith.cmpi ne, %45, %c0_i32_25 : i32
      scf.if %46 {
        %c0_26 = arith.constant 0 : index
        %c0_27 = arith.constant 0 : index
        %47 = vector.load %arg12[%c0_26, %c0_27] : memref<128x128xf32, #tpu.memory_space<vmem>>, vector<128x128xf32>
        %48 = arith.index_cast %8 : i32 to index
        %c0_28 = arith.constant 0 : index
        %49 = vector.load %arg11[%48, %c0_28] : memref<128x128xf32, #tpu.memory_space<vmem>>, vector<128x128xf32>
        %50 = arith.addf %49, %47 : vector<128x128xf32>
        %51 = arith.index_cast %8 : i32 to index
        %c0_29 = arith.constant 0 : index
        %52 = vector.load %arg11[%51, %c0_29] : memref<128x128xf32, #tpu.memory_space<vmem>>, vector<128x128xf32>
        tpu.vector_store %arg11[%51, %c0_29], %50 {strides = array<i32>} : memref<128x128xf32, #tpu.memory_space<vmem>>, vector<128x128xf32>,
        %53 = arith.truncf %47 : vector<128x128xf32> to vector<128x128xbf16>
        %54 = arith.index_cast %8 : i32 to index
        %c0_30 = arith.constant 0 : index
        %55 = vector.load %arg10[%54, %c0_30] : memref<128x128xbf16, #tpu.memory_space<vmem>>, vector<128x128xbf16>
        tpu.vector_store %arg10[%54, %c0_30], %53 {strides = array<i32>} : memref<128x128xbf16, #tpu.memory_space<vmem>>, vector<128x128xbf16>,
      } else {
      }
    } else {
    }
    %c1_i32_11 = arith.constant 1 : i32
    %25 = arith.cmpi eq, %21, %c1_i32_11 : i32
    %26 = arith.extui %25 : i1 to i32
    %c0_i32_12 = arith.constant 0 : i32
    %27 = arith.cmpi ne, %26, %c0_i32_12 : i32
    scf.if %27 {
      %c0_i32_17 = arith.constant 0 : i32
      %35 = arith.cmpi eq, %arg2, %c0_i32_17 : i32
      %36 = arith.extui %35 : i1 to i32
      %c0_i32_18 = arith.constant 0 : i32
      %37 = arith.cmpi ne, %36, %c0_i32_18 : i32
      scf.if %37 {
        %cst_26 = arith.constant 0.000000e+00 : f32
        %47 = vector.broadcast %cst_26 : f32 to vector<128x128xf32>
        %c0_27 = arith.constant 0 : index
        %c0_28 = arith.constant 0 : index
        %48 = vector.load %arg12[%c0_27, %c0_28] : memref<128x128xf32, #tpu.memory_space<vmem>>, vector<128x128xf32>
        tpu.vector_store %arg12[%c0_27, %c0_28], %47 {strides = array<i32>} : memref<128x128xf32, #tpu.memory_space<vmem>>, vector<128x128xf32>,
      } else {
      }
      %c0_19 = arith.constant 0 : index
      %c0_20 = arith.constant 0 : index
      %38 = vector.load %arg12[%c0_19, %c0_20] : memref<128x128xf32, #tpu.memory_space<vmem>>, vector<128x128xf32>
      %39 = arith.index_cast %10 : i32 to index
      %c0_21 = arith.constant 0 : index
      %40 = vector.load %arg10[%39, %c0_21] : memref<128x128xbf16, #tpu.memory_space<vmem>>, vector<128x128xbf16>
      %cst = arith.constant dense<0.000000e+00> : vector<128x128xf32>
      %41 = tpu.matmul %11, %40, %cst {dimension_numbers = #tpu.dot_dimension_numbers<[1], [0], [0], [1], [0, 0, 1, 1], [], []>} : vector<128x128xbf16>, vector<128x128xbf16>, vector<128x128xf32> -> vector<128x128xf32>
      %42 = arith.addf %38, %41 : vector<128x128xf32>
      %c0_22 = arith.constant 0 : index
      %c0_23 = arith.constant 0 : index
      %43 = vector.load %arg12[%c0_22, %c0_23] : memref<128x128xf32, #tpu.memory_space<vmem>>, vector<128x128xf32>
      tpu.vector_store %arg12[%c0_22, %c0_23], %42 {strides = array<i32>} : memref<128x128xf32, #tpu.memory_space<vmem>>, vector<128x128xf32>,
      %c0_i32_24 = arith.constant 0 : i32
      %44 = arith.cmpi eq, %arg2, %c0_i32_24 : i32
      %45 = arith.extui %44 : i1 to i32
      %c0_i32_25 = arith.constant 0 : i32
      %46 = arith.cmpi ne, %45, %c0_i32_25 : i32
      scf.if %46 {
        %c0_26 = arith.constant 0 : index
        %c0_27 = arith.constant 0 : index
        %47 = vector.load %arg12[%c0_26, %c0_27] : memref<128x128xf32, #tpu.memory_space<vmem>>, vector<128x128xf32>
        %48 = arith.index_cast %8 : i32 to index
        %c0_28 = arith.constant 0 : index
        %49 = vector.load %arg11[%48, %c0_28] : memref<128x128xf32, #tpu.memory_space<vmem>>, vector<128x128xf32>
        %50 = arith.addf %49, %47 : vector<128x128xf32>
        %51 = arith.index_cast %8 : i32 to index
        %c0_29 = arith.constant 0 : index
        %52 = vector.load %arg11[%51, %c0_29] : memref<128x128xf32, #tpu.memory_space<vmem>>, vector<128x128xf32>
        tpu.vector_store %arg11[%51, %c0_29], %50 {strides = array<i32>} : memref<128x128xf32, #tpu.memory_space<vmem>>, vector<128x128xf32>,
        %53 = arith.truncf %47 : vector<128x128xf32> to vector<128x128xbf16>
        %54 = arith.index_cast %8 : i32 to index
        %c0_30 = arith.constant 0 : index
        %55 = vector.load %arg9[%54, %c0_30] : memref<128x128xbf16, #tpu.memory_space<vmem>>, vector<128x128xbf16>
        tpu.vector_store %arg9[%54, %c0_30], %53 {strides = array<i32>} : memref<128x128xbf16, #tpu.memory_space<vmem>>, vector<128x128xbf16>,
      } else {
      }
    } else {
    }
    %c1_i32_13 = arith.constant 1 : i32
    %28 = arith.cmpi eq, %arg0, %c1_i32_13 : i32
    %c0_i32_14 = arith.constant 0 : i32
    %29 = arith.cmpi eq, %arg1, %c0_i32_14 : i32
    %c0_i32_15 = arith.constant 0 : i32
    %30 = arith.cmpi eq, %arg2, %c0_i32_15 : i32
    %31 = arith.andi %29, %30 : i1
    %32 = arith.andi %28, %31 : i1
    %33 = arith.extui %32 : i1 to i32
    %c0_i32_16 = arith.constant 0 : i32
    %34 = arith.cmpi ne, %33, %c0_i32_16 : i32
    scf.if %34 {
      %cst = arith.constant 0.000000e+00 : f32
      %35 = vector.broadcast %cst : f32 to vector<8x128xf32>
      %c0_17 = arith.constant 0 : index
      %c0_18 = arith.constant 0 : index
      %36 = vector.load %arg13[%c0_17, %c0_18] : memref<8x128xf32, #tpu.memory_space<vmem>>, vector<8x128xf32>
      tpu.vector_store %arg13[%c0_17, %c0_18], %35 {strides = array<i32>} : memref<8x128xf32, #tpu.memory_space<vmem>>, vector<8x128xf32>,
      %cst_19 = arith.constant 0.000000e+00 : f32
      %37 = vector.broadcast %cst_19 : f32 to vector<8x128xf32>
      %c0_20 = arith.constant 0 : index
      %c0_21 = arith.constant 0 : index
      %38 = vector.load %arg14[%c0_20, %c0_21] : memref<8x128xf32, #tpu.memory_space<vmem>>, vector<8x128xf32>
      tpu.vector_store %arg14[%c0_20, %c0_21], %37 {strides = array<i32>} : memref<8x128xf32, #tpu.memory_space<vmem>>, vector<8x128xf32>,
      %c0_i32_22 = arith.constant 0 : i32
      %c8_i32 = arith.constant 8 : i32
      %39 = arith.addi %c0_i32_22, %c8_i32 : i32
      %c1_i32_23 = arith.constant 1 : i32
      scf.for %arg15 = %c0_i32_22 to %39 step %c1_i32_23  : i32 {
        %48 = arith.index_cast %arg15 : i32 to index
        %49 = memref.load %arg3[%48] : memref<8xi32, #tpu.memory_space<smem>>
        %50 = arith.index_cast %arg15 : i32 to index
        %51 = memref.load %arg4[%50] : memref<8xi32, #tpu.memory_space<smem>>
        %c24_i32 = arith.constant 24 : i32
        %52 = arith.addi %51, %c24_i32 : i32
        %53 = arith.index_cast %49 : i32 to index
        %c0_33 = arith.constant 0 : index
        %54 = vector.load %arg11[%53, %c0_33] : memref<128x128xf32, #tpu.memory_space<vmem>>, vector<1x128xf32>
        %55 = arith.index_cast %arg15 : i32 to index
        %c0_34 = arith.constant 0 : index
        %56 = vector.load %arg13[%55, %c0_34] : memref<8x128xf32, #tpu.memory_space<vmem>>, vector<1x128xf32>
        tpu.vector_store %arg13[%55, %c0_34], %54 {strides = array<i32>} : memref<8x128xf32, #tpu.memory_space<vmem>>, vector<1x128xf32>,
        %57 = arith.index_cast %52 : i32 to index
        %c0_35 = arith.constant 0 : index
        %58 = vector.load %arg11[%57, %c0_35] : memref<128x128xf32, #tpu.memory_space<vmem>>, vector<1x128xf32>
        %59 = arith.index_cast %arg15 : i32 to index
        %c0_36 = arith.constant 0 : index
        %60 = vector.load %arg14[%59, %c0_36] : memref<8x128xf32, #tpu.memory_space<vmem>>, vector<1x128xf32>
        tpu.vector_store %arg14[%59, %c0_36], %58 {strides = array<i32>} : memref<8x128xf32, #tpu.memory_space<vmem>>, vector<1x128xf32>,
      }
      %c8_i32_24 = arith.constant 8 : i32
      %c0_25 = arith.constant 0 : index
      %c0_26 = arith.constant 0 : index
      %40 = vector.load %arg13[%c0_25, %c0_26] : memref<8x128xf32, #tpu.memory_space<vmem>>, vector<8x128xf32>
      %c0_27 = arith.constant 0 : index
      %c0_28 = arith.constant 0 : index
      %41 = vector.load %arg14[%c0_27, %c0_28] : memref<8x128xf32, #tpu.memory_space<vmem>>, vector<8x128xf32>
      %42 = arith.mulf %40, %41 : vector<8x128xf32>
      %cst_29 = arith.constant dense<0.000000e+00> : vector<8xf32>
      %43 = vector.multi_reduction <add>, %42, %cst_29 [1] : vector<8x128xf32> to vector<8xf32>
      %44 = vector.shape_cast %43 : vector<8xf32> to vector<8x1xf32>
      %cst_30 = arith.constant 0.111111112 : f32
      %45 = vector.broadcast %cst_30 : f32 to vector<8x1xf32>
      %46 = arith.mulf %44, %45 : vector<8x1xf32>
      %c0_31 = arith.constant 0 : index
      %c0_32 = arith.constant 0 : index
      %47 = vector.load %arg8[%c0_31, %c0_32] : memref<8x1xf32, #tpu.memory_space<vmem>>, vector<8x1xf32>
      tpu.vector_store %arg8[%c0_31, %c0_32], %46 {strides = array<i32>} : memref<8x1xf32, #tpu.memory_space<vmem>>, vector<8x1xf32>,
    } else {
    }
    return
  }
  func.func @transform_2(%arg0: i32, %arg1: i32, %arg2: i32, %arg3: memref<8xi32, #tpu.memory_space<smem>>, %arg4: memref<8xi32, #tpu.memory_space<smem>>) -> (i32, i32) {
    %c0_i32 = arith.constant 0 : i32
    return %arg1, %arg2 : i32, i32
  }
  func.func @transform_3(%arg0: i32, %arg1: i32, %arg2: i32, %arg3: memref<8xi32, #tpu.memory_space<smem>>, %arg4: memref<8xi32, #tpu.memory_space<smem>>) -> (i32, i32) {
    %c0_i32 = arith.constant 0 : i32
    %c0_i32_0 = arith.constant 0 : i32
    %c0_i32_1 = arith.constant 0 : i32
    return %c0_i32, %c0_i32_0 : i32, i32
  }
}

</mosaic_0001>

<llo_original>
// kernel: tpu_custom_call.1
$region0: #{tpu_custom_call.1}
  #allocation0 [shape = 'u32[]', space=smem, size = 0x4, offset = 0x4, fixed_abs, tag = 'smem constant byte address 0x4 - core index']
  #allocation1 [shape = 'u32[144,128]{1,0:T(1,128)}', space=vmem, size = 0x12000, scoped, tag = 'internal scratch']
  #allocation2 [shape = 'bf16[128,128]{1,0:T(16,128)(2,1)}', space=vmem, size = 0x8000, scoped, tag = 'scratch operand']
  #allocation3 [shape = 'bf16[128,128]{1,0:T(16,128)(2,1)}', space=vmem, size = 0x8000, scoped, tag = 'scratch operand']
  #allocation4 [shape = 'f32[128,128]{1,0:T(8,128)}', space=vmem, size = 0x10000, scoped, tag = 'scratch operand']
  #allocation5 [shape = 'f32[128,128]{1,0:T(8,128)}', space=vmem, size = 0x10000, scoped, tag = 'scratch operand']
  #allocation6 [shape = 'f32[8,128]{1,0:T(8,128)}', space=vmem, size = 0x1000, scoped, tag = 'scratch operand']
  #allocation7 [shape = 'f32[8,128]{1,0:T(8,128)}', space=vmem, size = 0x1000, scoped, tag = 'scratch operand']
  #allocation8 [shape = 's32[1]{0}', space=sflag, size = 0x4, scoped, tag = 'scoped memory for tpu_custom_call.1']
  #allocation9 [shape = 'u8[512]{0}', space=smem, size = 0x200, scoped, tag = 'prefetched SMEM operand 0']
  #allocation10 [shape = 'u8[512]{0}', space=smem, size = 0x200, scoped, tag = 'prefetched SMEM operand 1']
  #allocation14 [shape = 's32[]', space=sflag, size = 0x4, offset = 0, fixed_abs, tag = 'sflag constant byte address 0x0 - dummy sync flag']
  #allocation15 [shape = 's32[]', space=sflag, size = 0x4, offset = 0, fixed_abs, tag = 'sflag constant byte address 0x0 - dummy sync flag']
  #allocation16 [shape = 'u32[]', space=smem, size = 0x4, offset = 0x44, fixed_abs, tag = 'smem constant byte address 0x44 - assertion arg 0']
  #allocation17 [shape = 'u32[]', space=smem, size = 0x4, offset = 0x48, fixed_abs, tag = 'smem constant byte address 0x48 - assertion arg 1']
  #allocation19 [shape = 's32[]', space=sflag, size = 0x4, offset = 0, fixed_abs, tag = 'sflag constant byte address 0x0 - dummy sync flag']
  #allocation20 [shape = 's32[]', space=sflag, size = 0x4, offset = 0, fixed_abs, tag = 'sflag constant byte address 0x0 - dummy sync flag']
  %s0 = inlined_call_operand.hbm [shape: s32[8], index: 0, kind: input, shape index: {}]
  %s1 = inlined_call_operand.vmem [shape: s32[8], index: 1, kind: input, shape index: {}]
  %s2 = inlined_call_operand.hbm [shape: f32[128,128], index: 2, kind: input, shape index: {}]
  %s3 = inlined_call_operand.hbm [shape: bf16[128,128], index: 3, kind: input, shape index: {}]
  %s4 = inlined_call_operand.hbm [shape: bf16[128,128], index: 4, kind: input, shape index: {}]
  %s5 = inlined_call_operand.vmem [shape: f32[8,1], index: 5, kind: output, shape index: {}]
  %s6 = sld [smem:[#allocation0]]
  $region90: #{tpu_custom_call.1} parent=0
    _
  %s8 = ssub.s32 1, %s6
  %s9 = scalar_select 0, %s8, %s6
  %11 = dma.hbm_to_smem %s0, 16, [#allocation9], [#allocation8]
  %s12 = sshll.u32 %s1, 4
  %s13 = int_to_ptr.vmem [resolvable:$true] %s12
  %15 = dma.vmem_to_smem %s13, 16, [#allocation10], [#allocation8]
  %16 = dma.done [#allocation8], 32
  %17 = sfence
  $region1: #{tpu_custom_call.1} parent=0
    #allocation11 [shape = 'u8[32768]{0}', space=vmem, size = 0x8000, scoped, tag = 'input window, operand 4, single buffered']
    #allocation12 [shape = 's32[2]{0}', space=sflag, size = 0x8, scoped, tag = 'scoped memory for tpu_custom_call.1']
    %18 = vsyncpa [#allocation12], 0
    loop: start=0, step=1, limit=4
    $region2: #{tpu_custom_call.1} parent=1 // loop_pre_header
      _
    $region3: #{tpu_custom_call.1} parent=1 // loop_header
      %s20 = sphi 0, %s24
      %p21 = scmp.ge.s32.totalorder %s20, 4
      %s27 = sphi 0, %s46
      %s28 = sphi 0, %s42
      %s29 = sphi 0, %s38
      %s30 = sphi 0, %s27
      %s31 = sphi 0, %s28
      %s32 = sphi 0, %s29
      %s33 = sphi 0, %s30
      %s34 = sphi 0, %s31
      %s35 = sphi 0, %s32
      %s51 = sphi 0, %s53
      %s54 = sphi 0, %s51
      %s55 = sphi 0, %s54
      %s71 = sphi 0, %s55
      %s75 = sphi 0, %s75
      %s77 = sphi 0, %s75
      %s78 = sphi 0, %s77
      %s92 = sphi 0, %s78
    $region4: #{tpu_custom_call.1} parent=1 // loop_header_branch
      %23 = sbr.rel (%p21) target = $region8
    $region5: #{tpu_custom_call.1} parent=1 // loop_body
      %s25 = ssub.s32 %s20, 1
      %s26 = ssub.s32 %s20, 2
      %s36 = sadd.s32 1, %s29
      %p37 = scmp.ge.s32.totalorder %s36, 1
      %s38 = scalar_select %p37, 0, %s36
      %s39 = sadd.s32 1, %s28
      %s40 = scalar_select %p37, %s39, %s28
      %p41 = scmp.ge.s32.totalorder %s40, 1
      %s42 = scalar_select %p41, 0, %s40
      %s43 = sadd.s32 1, %s27
      %s44 = scalar_select %p41, %s43, %s27
      %p45 = scmp.ge.s32.totalorder %s44, 2
      %s46 = scalar_select %p45, 0, %s44
      %s47 = ssub.s32 %s28, %s42
      %s48 = ssub.s32 %s29, %s38
      %s49 = sor.u32 %s47, %s48
      %p50 = scmp.eq.s32.totalorder %s49, 0
      %s52 = sadd.s32 %s51, 1
      %s53 = scalar_select %p50, %s51, %s52
      %p56 = pneg %p50
      %p57 = scmp.eq.s32.totalorder %s20, 1
      %p58 = por %p56, %p57
      %p59 = scmp.ne.s32.totalorder %s51, %s54
      %p60 = scmp.eq.s32.totalorder %s20, 0
      %p61 = por %p59, %p60
      %p62 = scmp.ne.s32.totalorder %s51, %s54
      %p63 = scmp.eq.s32.totalorder %s25, 1
      %p64 = por %p62, %p63
      %p65 = scmp.ne.s32.totalorder %s54, %s55
      %p66 = scmp.eq.s32.totalorder %s25, 0
      %p67 = por %p65, %p66
      %p68 = scmp.ne.s32.totalorder %s54, %s55
      %p69 = scmp.eq.s32.totalorder %s26, 1
      %p70 = por %p68, %p69
      %p72 = scmp.ne.s32.totalorder %s55, %s71
      %p73 = scmp.eq.s32.totalorder %s26, 0
      %p74 = por %p72, %p73
      %s76 = sadd.s32 %s75, 1
      %p79 = scmp.eq.s32.totalorder %s20, 1
      %p80 = scmp.ne.s32.totalorder %s75, %s77
      %p81 = scmp.eq.s32.totalorder %s20, 0
      %p82 = por %p80, %p81
      %p83 = scmp.ne.s32.totalorder %s75, %s77
      %p84 = scmp.eq.s32.totalorder %s25, 1
      %p85 = por %p83, %p84
      %p86 = scmp.ne.s32.totalorder %s77, %s78
      %p87 = scmp.eq.s32.totalorder %s25, 0
      %p88 = por %p86, %p87
      %p89 = scmp.ne.s32.totalorder %s77, %s78
      %p90 = scmp.eq.s32.totalorder %s26, 1
      %p91 = por %p89, %p90
      %p93 = scmp.ne.s32.totalorder %s78, %s92
      %p94 = scmp.eq.s32.totalorder %s26, 0
      %p95 = por %p93, %p94
      %p96 = scmp.le.s32.totalorder 1, %s20
      %p97 = scmp.lt.s32.totalorder %s20, 3
      %p98 = pnand %p96, %p97
      %p99 = pneg %p98
      // Predicated region
      $region9: #{tpu_custom_call.1} parent=5 // pred_check
        _
      $region10: #{tpu_custom_call.1} parent=5 // pred_check_branch
        %101 = sbr.rel (%p98) target = $region12
      $region11: #{tpu_custom_call.1} parent=5 // pred_region
        %s102 = ssub.s32 %s20, 1
        // Predicated region
        $region13: #{tpu_custom_call.1} parent=11 // pred_check
          %p103 = pneg %p67
        $region14: #{tpu_custom_call.1} parent=11 // pred_check_branch
          %105 = sbr.rel (%p103) target = $region16
        $region15: #{tpu_custom_call.1} parent=11 // pred_region
          %s106 = smul.u32 16, %s31
          %s108 = ssub.s32 1024, 1024
          %109 = vsyncadd [#allocation12], %s108
          %s110 = sadd.s32 %s32, %s106
          %s111 = smul.addr %s110, 64
          %s112 = scalar_lea.hbm %s4, %s111
          %s113 = sshll.u32 [#allocation11], 4
          %s114 = int_to_ptr.vmem [resolvable:$true] %s113
          %119 = dma.hbm_to_vmem [thread:$0]  %s112, 1024, %s114, [#allocation12], 64, 64, 4
        $region16: #{tpu_custom_call.1} parent=11 // pred_fallthru
          _
      $region12: #{tpu_custom_call.1} parent=5 // pred_fallthru
        _
      %p120 = scmp.lt.s32.totalorder %s20, 2
      // Predicated region
      $region17: #{tpu_custom_call.1} parent=5 // pred_check
        %p121 = pneg %p120
      $region18: #{tpu_custom_call.1} parent=5 // pred_check_branch
        %123 = sbr.rel (%p121) target = $region20
      $region19: #{tpu_custom_call.1} parent=5 // pred_region
        _
      $region20: #{tpu_custom_call.1} parent=5 // pred_fallthru
        _
      %p124 = scmp.le.s32.totalorder 1, %s20
      %p125 = scmp.lt.s32.totalorder %s20, 3
      %p126 = pnand %p124, %p125
      %p127 = pneg %p126
      // Predicated region
      $region21: #{tpu_custom_call.1} parent=5 // pred_check
        _
      $region22: #{tpu_custom_call.1} parent=5 // pred_check_branch
        %129 = sbr.rel (%p126) target = $region24
      $region23: #{tpu_custom_call.1} parent=5 // pred_region
        %s130 = ssub.s32 %s20, 1
        // Predicated region
        $region25: #{tpu_custom_call.1} parent=23 // pred_check
          %p131 = pneg %p67
        $region26: #{tpu_custom_call.1} parent=23 // pred_check_branch
          %133 = sbr.rel (%p131) target = $region28
        $region27: #{tpu_custom_call.1} parent=23 // pred_region
          %134 = dma.done [#allocation12], 1024
        $region28: #{tpu_custom_call.1} parent=23 // pred_fallthru
          _
        %p135 = pneg %p67
        %p136 = pneg %p64
        %p137 = pneg %p88
        %p138 = pneg %p85
        %s139 = smul.u32 16, %s31
        %p141 = scmp.eq.s32.totalorder %s30, 0
        %p142 = scmp.eq.s32.totalorder %s31, 0
        %p143 = scmp.eq.s32.totalorder %s32, 0
        %p144 = pnand %p142, %p143
        %p145 = pneg %p144
        %p146 = pnand %p141, %p145
        %p147 = pneg %p146
        // Predicated region
        $region29: #{tpu_custom_call.1} parent=23 // pred_check
          _
        $region30: #{tpu_custom_call.1} parent=23 // pred_check_branch
          %149 = sbr.rel (%p146) target = $region32
        $region31: #{tpu_custom_call.1} parent=23 // pred_region
          $region33: #{tpu_custom_call.1} parent=31
            #allocation13 [shape = 's32[1]{0}', space=sflag, size = 0x4, scoped, tag = 'scoped memory for tpu_custom_call.1']
            // Predicated region
            $region34: #{tpu_custom_call.1} parent=33 // pred_check
              _
            $region35: #{tpu_custom_call.1} parent=33 // pred_check_branch
              %151 = sbr.rel target = $region37
            $region36: #{tpu_custom_call.1} parent=33 // pred_region
              %152 = sst [smem:[#allocation16]] [#allocation15]
              %153 = sst [smem:[#allocation17]] [#allocation14]
            $region37: #{tpu_custom_call.1} parent=33 // pred_fallthru
              _
            %155 = shalt.err (0)
            %s157 = sshll.u32 [#allocation4], 4
            %s158 = int_to_ptr.vmem [resolvable:$true] %s157
            %160 = dma.hbm_to_vmem [thread:$0]  %s2, 2048, %s158, [#allocation13]
            %s161 = smul.u32 128, 1
            %s162 = sshll.u32 %s161, 4
            %163 = dma.done [#allocation13], %s162
          $region38: #{tpu_custom_call.1} parent=31
            #allocation18 [shape = 's32[1]{0}', space=sflag, size = 0x4, scoped, tag = 'scoped memory for tpu_custom_call.1']
            // Predicated region
            $region39: #{tpu_custom_call.1} parent=38 // pred_check
              _
            $region40: #{tpu_custom_call.1} parent=38 // pred_check_branch
              %165 = sbr.rel target = $region42
            $region41: #{tpu_custom_call.1} parent=38 // pred_region
              %166 = sst [smem:[#allocation16]] [#allocation20]
              %167 = sst [smem:[#allocation17]] [#allocation19]
            $region42: #{tpu_custom_call.1} parent=38 // pred_fallthru
              _
            %169 = shalt.err (0)
            %s171 = sshll.u32 [#allocation2], 4
            %s172 = int_to_ptr.vmem [resolvable:$true] %s171
            %174 = dma.hbm_to_vmem [thread:$0]  %s3, 1024, %s172, [#allocation18]
            %s175 = smul.u32 4, 16
            %s176 = smul.u32 %s175, 1
            %s177 = sshll.u32 %s176, 4
            %178 = dma.done [#allocation18], %s177
        $region32: #{tpu_custom_call.1} parent=23 // pred_fallthru
          _
        %s179 = smul.u32 %s31, 128
        %s180 = smul.u32 %s32, 128
        %v181 = vld [vmem:[#allocation11] sm:$0xf]
        %v182 = vld [vmem:[#allocation11 + $0x4] sm:$0xf]
        %v183 = vld [vmem:[#allocation11 + $0x8] sm:$0xf]
        %v184 = vld [vmem:[#allocation11 + $0xc] sm:$0xf]
        %v185 = vld [vmem:[#allocation11 + $0x10] sm:$0xf]
        %v186 = vld [vmem:[#allocation11 + $0x14] sm:$0xf]
        %v187 = vld [vmem:[#allocation11 + $0x18] sm:$0xf]
        %v188 = vld [vmem:[#allocation11 + $0x1c] sm:$0xf]
        %v189 = vld [vmem:[#allocation11 + $0x20] sm:$0xf]
        %v190 = vld [vmem:[#allocation11 + $0x24] sm:$0xf]
        %v191 = vld [vmem:[#allocation11 + $0x28] sm:$0xf]
        %v192 = vld [vmem:[#allocation11 + $0x2c] sm:$0xf]
        %v193 = vld [vmem:[#allocation11 + $0x30] sm:$0xf]
        %v194 = vld [vmem:[#allocation11 + $0x34] sm:$0xf]
        %v195 = vld [vmem:[#allocation11 + $0x38] sm:$0xf]
        %v196 = vld [vmem:[#allocation11 + $0x3c] sm:$0xf]
        %p197 = scmp.lt.s32.totalorder %s30, 0
        %s198 = ssub.s32 0, %s30
        %s199 = scalar_select %p197, %s198, %s30
        %s200 = sand.u32 %s199, 1
        %s201 = ssub.s32 0, %s200
        %s202 = scalar_select %p197, %s201, %s200
        %p203 = scmp.ne.s32.totalorder %s202, 0
        %p204 = scmp.lt.s32.totalorder %s202, 0
        %p205 = pnand %p204, %p203
        %p206 = pneg %p205
        %s207 = sadd.s32 %s202, 2
        %s208 = scalar_select %p206, %s207, %s202
        %p209 = scmp.eq.s32.totalorder %s208, 0
        // Predicated region
        $region43: #{tpu_custom_call.1} parent=23 // pred_check
          %p210 = pneg %p209
        $region44: #{tpu_custom_call.1} parent=23 // pred_check_branch
          %212 = sbr.rel (%p210) target = $region46
        $region45: #{tpu_custom_call.1} parent=23 // pred_region
          // Predicated region
          $region47: #{tpu_custom_call.1} parent=45 // pred_check
            %p213 = pneg %p143
          $region48: #{tpu_custom_call.1} parent=45 // pred_check_branch
            %215 = sbr.rel (%p213) target = $region50
          $region49: #{tpu_custom_call.1} parent=45 // pred_region
            %216 = vst [vmem:[#allocation5] sm:$0xff] 0.0
            %217 = vst [vmem:[#allocation5 + $0x8] sm:$0xff] 0.0
            %218 = vst [vmem:[#allocation5 + $0x10] sm:$0xff] 0.0
            %219 = vst [vmem:[#allocation5 + $0x18] sm:$0xff] 0.0
            %220 = vst [vmem:[#allocation5 + $0x20] sm:$0xff] 0.0
            %221 = vst [vmem:[#allocation5 + $0x28] sm:$0xff] 0.0
            %222 = vst [vmem:[#allocation5 + $0x30] sm:$0xff] 0.0
            %223 = vst [vmem:[#allocation5 + $0x38] sm:$0xff] 0.0
            %224 = vst [vmem:[#allocation5 + $0x40] sm:$0xff] 0.0
            %225 = vst [vmem:[#allocation5 + $0x48] sm:$0xff] 0.0
            %226 = vst [vmem:[#allocation5 + $0x50] sm:$0xff] 0.0
            %227 = vst [vmem:[#allocation5 + $0x58] sm:$0xff] 0.0
            %228 = vst [vmem:[#allocation5 + $0x60] sm:$0xff] 0.0
            %229 = vst [vmem:[#allocation5 + $0x68] sm:$0xff] 0.0
            %230 = vst [vmem:[#allocation5 + $0x70] sm:$0xff] 0.0
            %231 = vst [vmem:[#allocation5 + $0x78] sm:$0xff] 0.0
          $region50: #{tpu_custom_call.1} parent=45 // pred_fallthru
            _
          %v232 = vld [vmem:[#allocation5] sm:$0xff]
          %v233 = vld [vmem:[#allocation5 + $0x8] sm:$0xff]
          %v234 = vld [vmem:[#allocation5 + $0x10] sm:$0xff]
          %v235 = vld [vmem:[#allocation5 + $0x18] sm:$0xff]
          %v236 = vld [vmem:[#allocation5 + $0x20] sm:$0xff]
          %v237 = vld [vmem:[#allocation5 + $0x28] sm:$0xff]
          %v238 = vld [vmem:[#allocation5 + $0x30] sm:$0xff]
          %v239 = vld [vmem:[#allocation5 + $0x38] sm:$0xff]
          %v240 = vld [vmem:[#allocation5 + $0x40] sm:$0xff]
          %v241 = vld [vmem:[#allocation5 + $0x48] sm:$0xff]
          %v242 = vld [vmem:[#allocation5 + $0x50] sm:$0xff]
          %v243 = vld [vmem:[#allocation5 + $0x58] sm:$0xff]
          %v244 = vld [vmem:[#allocation5 + $0x60] sm:$0xff]
          %v245 = vld [vmem:[#allocation5 + $0x68] sm:$0xff]
          %v246 = vld [vmem:[#allocation5 + $0x70] sm:$0xff]
          %v247 = vld [vmem:[#allocation5 + $0x78] sm:$0xff]
          %s248 = sshra.s32 %s180, 4
          %s249 = sand.u32 %s180, 15
          %s250 = smul.addr %s248, 8
          %s251 = scalar_lea.vmem [#allocation2], %s250
          %v252 = vld [vmem:[%s251] sm:$0xff]
          %v253 = vld [vmem:[%s251 + $0x8] sm:$0xff]
          %v254 = vld [vmem:[%s251 + $0x10] sm:$0xff]
          %v255 = vld [vmem:[%s251 + $0x18] sm:$0xff]
          %v256 = vld [vmem:[%s251 + $0x20] sm:$0xff]
          %v257 = vld [vmem:[%s251 + $0x28] sm:$0xff]
          %v258 = vld [vmem:[%s251 + $0x30] sm:$0xff]
          %v259 = vld [vmem:[%s251 + $0x38] sm:$0xff]
          %v276 = vunpack.c.l.b16 %v181
          %v277 = vunpack.c.l.b16 %v182
          %v278 = vunpack.c.l.b16 %v183
          %v279 = vunpack.c.l.b16 %v184
          %v280 = vunpack.c.l.b16 %v185
          %v281 = vunpack.c.l.b16 %v186
          %v282 = vunpack.c.l.b16 %v187
          %v283 = vunpack.c.l.b16 %v188
          %v284 = vunpack.c.l.b16 %v189
          %v285 = vunpack.c.l.b16 %v190
          %v286 = vunpack.c.l.b16 %v191
          %v287 = vunpack.c.l.b16 %v192
          %v288 = vunpack.c.l.b16 %v193
          %v289 = vunpack.c.l.b16 %v194
          %v290 = vunpack.c.l.b16 %v195
          %v291 = vunpack.c.l.b16 %v196
          %v292 = vpack.c.b16 %v277, %v276
          %v293 = vpack.c.b16 %v279, %v278
          %v294 = vpack.c.b16 %v281, %v280
          %v295 = vpack.c.b16 %v283, %v282
          %v296 = vpack.c.b16 %v285, %v284
          %v297 = vpack.c.b16 %v287, %v286
          %v298 = vpack.c.b16 %v289, %v288
          %v299 = vpack.c.b16 %v291, %v290
          %308 = vmatprep.subr.bf16.mxu0 0
          %309 = vmatpush1.bf16.msra.mxu0 %v252
          %310 = vmatprep.subr.bf16.mxu0 0
          %311 = vmatpush1.bf16.msra.mxu0 %v253
          %312 = vmatprep.subr.bf16.mxu0 0
          %313 = vmatpush1.bf16.msra.mxu0 %v254
          %314 = vmatprep.subr.bf16.mxu0 0
          %315 = vmatpush1.bf16.msra.mxu0 %v255
          %316 = vmatprep.subr.bf16.mxu0 0
          %317 = vmatpush1.bf16.msra.mxu0 %v256
          %318 = vmatprep.subr.bf16.mxu0 0
          %319 = vmatpush1.bf16.msra.mxu0 %v257
          %320 = vmatprep.subr.bf16.mxu0 0
          %321 = vmatpush1.bf16.msra.mxu0 %v258
          %322 = vmatprep.subr.bf16.mxu0 0
          %323 = vmatpush1.bf16.msra.mxu0 %v259
          %324 = vmatprep.subr.bf16.mxu0 0
          %325 = vmatpush1.bf16.msra.mxu0 0
          %326 = vmatprep.subr.bf16.mxu0 0
          %327 = vmatpush1.bf16.msra.mxu0 0
          %328 = vmatprep.subr.bf16.mxu0 0
          %329 = vmatpush1.bf16.msra.mxu0 0
          %330 = vmatprep.subr.bf16.mxu0 0
          %331 = vmatpush1.bf16.msra.mxu0 0
          %332 = vmatprep.subr.bf16.mxu0 0
          %333 = vmatpush1.bf16.msra.mxu0 0
          %334 = vmatprep.subr.bf16.mxu0 0
          %335 = vmatpush1.bf16.msra.mxu0 0
          %336 = vmatprep.subr.bf16.mxu0 0
          %337 = vmatpush1.bf16.msra.mxu0 0
          %338 = vmatprep.subr.bf16.mxu0 0
          %339 = vmatpush1.bf16.msra.mxu0 0
          %340 = vmatprep.mubr.bf16.mxu0 0
          %341 = vmatmul.mubr.bf16.gmra.mrb[0].mxu0 %v292
          %v342 = vpop.f32.mrb[0].mxu0
          %v343 = vadd.f32 0.0, %v342
          %v344 = vpop.f32.mrb[0].mxu0
          %v345 = vpop.f32.mrb[0].mxu0
          %v346 = vadd.f32 0.0, %v345
          %v347 = vpop.f32.mrb[0].mxu0
          %348 = vmatprep.mubr.bf16.mxu0 0
          %349 = vmatmul.mubr.bf16.gmra.mrb[0].mxu0 %v293
          %v350 = vpop.f32.mrb[0].mxu0
          %v351 = vadd.f32 0.0, %v350
          %v352 = vpop.f32.mrb[0].mxu0
          %v353 = vpop.f32.mrb[0].mxu0
          %v354 = vadd.f32 0.0, %v353
          %v355 = vpop.f32.mrb[0].mxu0
          %356 = vmatprep.mubr.bf16.mxu0 0
          %357 = vmatmul.mubr.bf16.gmra.mrb[0].mxu0 %v294
          %v358 = vpop.f32.mrb[0].mxu0
          %v359 = vadd.f32 0.0, %v358
          %v360 = vpop.f32.mrb[0].mxu0
          %v361 = vpop.f32.mrb[0].mxu0
          %v362 = vadd.f32 0.0, %v361
          %v363 = vpop.f32.mrb[0].mxu0
          %364 = vmatprep.mubr.bf16.mxu0 0
          %365 = vmatmul.mubr.bf16.gmra.mrb[0].mxu0 %v295
          %v366 = vpop.f32.mrb[0].mxu0
          %v367 = vadd.f32 0.0, %v366
          %v368 = vpop.f32.mrb[0].mxu0
          %v369 = vpop.f32.mrb[0].mxu0
          %v370 = vadd.f32 0.0, %v369
          %v371 = vpop.f32.mrb[0].mxu0
          %372 = vmatprep.mubr.bf16.mxu0 0
          %373 = vmatmul.mubr.bf16.gmra.mrb[0].mxu0 %v296
          %v374 = vpop.f32.mrb[0].mxu0
          %v375 = vadd.f32 0.0, %v374
          %v376 = vpop.f32.mrb[0].mxu0
          %v377 = vpop.f32.mrb[0].mxu0
          %v378 = vadd.f32 0.0, %v377
          %v379 = vpop.f32.mrb[0].mxu0
          %380 = vmatprep.mubr.bf16.mxu0 0
          %381 = vmatmul.mubr.bf16.gmra.mrb[0].mxu0 %v297
          %v382 = vpop.f32.mrb[0].mxu0
          %v383 = vadd.f32 0.0, %v382
          %v384 = vpop.f32.mrb[0].mxu0
          %v385 = vpop.f32.mrb[0].mxu0
          %v386 = vadd.f32 0.0, %v385
          %v387 = vpop.f32.mrb[0].mxu0
          %388 = vmatprep.mubr.bf16.mxu0 0
          %389 = vmatmul.mubr.bf16.gmra.mrb[0].mxu0 %v298
          %v390 = vpop.f32.mrb[0].mxu0
          %v391 = vadd.f32 0.0, %v390
          %v392 = vpop.f32.mrb[0].mxu0
          %v393 = vpop.f32.mrb[0].mxu0
          %v394 = vadd.f32 0.0, %v393
          %v395 = vpop.f32.mrb[0].mxu0
          %396 = vmatprep.mubr.bf16.mxu0 0
          %397 = vmatmul.mubr.bf16.gmra.mrb[0].mxu0 %v299
          %v398 = vpop.f32.mrb[0].mxu0
          %v399 = vadd.f32 0.0, %v398
          %v400 = vpop.f32.mrb[0].mxu0
          %v401 = vpop.f32.mrb[0].mxu0
          %v402 = vadd.f32 0.0, %v401
          %v403 = vpop.f32.mrb[0].mxu0
          %404 = vdwg.mxu0
          %v405 = vadd.f32 %v232, %v343
          %v406 = vadd.f32 %v233, %v346
          %v407 = vadd.f32 %v234, %v351
          %v408 = vadd.f32 %v235, %v354
          %v409 = vadd.f32 %v236, %v359
          %v410 = vadd.f32 %v237, %v362
          %v411 = vadd.f32 %v238, %v367
          %v412 = vadd.f32 %v239, %v370
          %v413 = vadd.f32 %v240, %v375
          %v414 = vadd.f32 %v241, %v378
          %v415 = vadd.f32 %v242, %v383
          %v416 = vadd.f32 %v243, %v386
          %v417 = vadd.f32 %v244, %v391
          %v418 = vadd.f32 %v245, %v394
          %v419 = vadd.f32 %v246, %v399
          %v420 = vadd.f32 %v247, %v402
          %421 = vst [vmem:[#allocation5] sm:$0xff] %v405
          %422 = vst [vmem:[#allocation5 + $0x8] sm:$0xff] %v406
          %423 = vst [vmem:[#allocation5 + $0x10] sm:$0xff] %v407
          %424 = vst [vmem:[#allocation5 + $0x18] sm:$0xff] %v408
          %425 = vst [vmem:[#allocation5 + $0x20] sm:$0xff] %v409
          %426 = vst [vmem:[#allocation5 + $0x28] sm:$0xff] %v410
          %427 = vst [vmem:[#allocation5 + $0x30] sm:$0xff] %v411
          %428 = vst [vmem:[#allocation5 + $0x38] sm:$0xff] %v412
          %429 = vst [vmem:[#allocation5 + $0x40] sm:$0xff] %v413
          %430 = vst [vmem:[#allocation5 + $0x48] sm:$0xff] %v414
          %431 = vst [vmem:[#allocation5 + $0x50] sm:$0xff] %v415
          %432 = vst [vmem:[#allocation5 + $0x58] sm:$0xff] %v416
          %433 = vst [vmem:[#allocation5 + $0x60] sm:$0xff] %v417
          %434 = vst [vmem:[#allocation5 + $0x68] sm:$0xff] %v418
          %435 = vst [vmem:[#allocation5 + $0x70] sm:$0xff] %v419
          %436 = vst [vmem:[#allocation5 + $0x78] sm:$0xff] %v420
          // Predicated region
          $region51: #{tpu_custom_call.1} parent=45 // pred_check
            %p437 = pneg %p143
          $region52: #{tpu_custom_call.1} parent=45 // pred_check_branch
            %439 = sbr.rel (%p437) target = $region54
          $region53: #{tpu_custom_call.1} parent=45 // pred_region
            %v440 = vld [vmem:[#allocation5] sm:$0xff]
            %v441 = vld [vmem:[#allocation5 + $0x8] sm:$0xff]
            %v442 = vld [vmem:[#allocation5 + $0x10] sm:$0xff]
            %v443 = vld [vmem:[#allocation5 + $0x18] sm:$0xff]
            %v444 = vld [vmem:[#allocation5 + $0x20] sm:$0xff]
            %v445 = vld [vmem:[#allocation5 + $0x28] sm:$0xff]
            %v446 = vld [vmem:[#allocation5 + $0x30] sm:$0xff]
            %v447 = vld [vmem:[#allocation5 + $0x38] sm:$0xff]
            %v448 = vld [vmem:[#allocation5 + $0x40] sm:$0xff]
            %v449 = vld [vmem:[#allocation5 + $0x48] sm:$0xff]
            %v450 = vld [vmem:[#allocation5 + $0x50] sm:$0xff]
            %v451 = vld [vmem:[#allocation5 + $0x58] sm:$0xff]
            %v452 = vld [vmem:[#allocation5 + $0x60] sm:$0xff]
            %v453 = vld [vmem:[#allocation5 + $0x68] sm:$0xff]
            %v454 = vld [vmem:[#allocation5 + $0x70] sm:$0xff]
            %v455 = vld [vmem:[#allocation5 + $0x78] sm:$0xff]
            %s456 = scalar_lea.vmem [#allocation4], %s179
            %v457 = vld [vmem:[%s456] sm:$0xff]
            %v458 = vld [vmem:[%s456 + $0x8] sm:$0xff]
            %v459 = vld [vmem:[%s456 + $0x10] sm:$0xff]
            %v460 = vld [vmem:[%s456 + $0x18] sm:$0xff]
            %v461 = vld [vmem:[%s456 + $0x20] sm:$0xff]
            %v462 = vld [vmem:[%s456 + $0x28] sm:$0xff]
            %v463 = vld [vmem:[%s456 + $0x30] sm:$0xff]
            %v464 = vld [vmem:[%s456 + $0x38] sm:$0xff]
            %v465 = vld [vmem:[%s456 + $0x40] sm:$0xff]
            %v466 = vld [vmem:[%s456 + $0x48] sm:$0xff]
            %v467 = vld [vmem:[%s456 + $0x50] sm:$0xff]
            %v468 = vld [vmem:[%s456 + $0x58] sm:$0xff]
            %v469 = vld [vmem:[%s456 + $0x60] sm:$0xff]
            %v470 = vld [vmem:[%s456 + $0x68] sm:$0xff]
            %v471 = vld [vmem:[%s456 + $0x70] sm:$0xff]
            %v472 = vld [vmem:[%s456 + $0x78] sm:$0xff]
            %v473 = vadd.f32 %v457, %v440
            %v474 = vadd.f32 %v458, %v441
            %v475 = vadd.f32 %v459, %v442
            %v476 = vadd.f32 %v460, %v443
            %v477 = vadd.f32 %v461, %v444
            %v478 = vadd.f32 %v462, %v445
            %v479 = vadd.f32 %v463, %v446
            %v480 = vadd.f32 %v464, %v447
            %v481 = vadd.f32 %v465, %v448
            %v482 = vadd.f32 %v466, %v449
            %v483 = vadd.f32 %v467, %v450
            %v484 = vadd.f32 %v468, %v451
            %v485 = vadd.f32 %v469, %v452
            %v486 = vadd.f32 %v470, %v453
            %v487 = vadd.f32 %v471, %v454
            %v488 = vadd.f32 %v472, %v455
            %489 = vst [vmem:[%s456] sm:$0xff] %v473
            %490 = vst [vmem:[%s456 + $0x8] sm:$0xff] %v474
            %491 = vst [vmem:[%s456 + $0x10] sm:$0xff] %v475
            %492 = vst [vmem:[%s456 + $0x18] sm:$0xff] %v476
            %493 = vst [vmem:[%s456 + $0x20] sm:$0xff] %v477
            %494 = vst [vmem:[%s456 + $0x28] sm:$0xff] %v478
            %495 = vst [vmem:[%s456 + $0x30] sm:$0xff] %v479
            %496 = vst [vmem:[%s456 + $0x38] sm:$0xff] %v480
            %497 = vst [vmem:[%s456 + $0x40] sm:$0xff] %v481
            %498 = vst [vmem:[%s456 + $0x48] sm:$0xff] %v482
            %499 = vst [vmem:[%s456 + $0x50] sm:$0xff] %v483
            %500 = vst [vmem:[%s456 + $0x58] sm:$0xff] %v484
            %501 = vst [vmem:[%s456 + $0x60] sm:$0xff] %v485
            %502 = vst [vmem:[%s456 + $0x68] sm:$0xff] %v486
            %503 = vst [vmem:[%s456 + $0x70] sm:$0xff] %v487
            %504 = vst [vmem:[%s456 + $0x78] sm:$0xff] %v488
            %v505 = vpack.c.bf16 %v441, %v440
            %v506 = vpack.c.bf16 %v443, %v442
            %v507 = vpack.c.bf16 %v445, %v444
            %v508 = vpack.c.bf16 %v447, %v446
            %v509 = vpack.c.bf16 %v449, %v448
            %v510 = vpack.c.bf16 %v451, %v450
            %v511 = vpack.c.bf16 %v453, %v452
            %v512 = vpack.c.bf16 %v455, %v454
            %s513 = sshra.s32 %s179, 4
            %s514 = sand.u32 %s179, 15
            %s515 = smul.addr %s513, 8
            %s516 = scalar_lea.vmem [#allocation3], %s515
            %517 = vst [vmem:[%s516] sm:$0xff] %v505
            %518 = vst [vmem:[%s516 + $0x8] sm:$0xff] %v506
            %519 = vst [vmem:[%s516 + $0x10] sm:$0xff] %v507
            %520 = vst [vmem:[%s516 + $0x18] sm:$0xff] %v508
            %521 = vst [vmem:[%s516 + $0x20] sm:$0xff] %v509
            %522 = vst [vmem:[%s516 + $0x28] sm:$0xff] %v510
            %523 = vst [vmem:[%s516 + $0x30] sm:$0xff] %v511
            %524 = vst [vmem:[%s516 + $0x38] sm:$0xff] %v512
          $region54: #{tpu_custom_call.1} parent=45 // pred_fallthru
            _
        $region46: #{tpu_custom_call.1} parent=23 // pred_fallthru
          _
        %p525 = scmp.eq.s32.totalorder %s208, 1
        // Predicated region
        $region55: #{tpu_custom_call.1} parent=23 // pred_check
          %p526 = pneg %p525
        $region56: #{tpu_custom_call.1} parent=23 // pred_check_branch
          %528 = sbr.rel (%p526) target = $region58
        $region57: #{tpu_custom_call.1} parent=23 // pred_region
          // Predicated region
          $region59: #{tpu_custom_call.1} parent=57 // pred_check
            %p529 = pneg %p143
          $region60: #{tpu_custom_call.1} parent=57 // pred_check_branch
            %531 = sbr.rel (%p529) target = $region62
          $region61: #{tpu_custom_call.1} parent=57 // pred_region
            %532 = vst [vmem:[#allocation5] sm:$0xff] 0.0
            %533 = vst [vmem:[#allocation5 + $0x8] sm:$0xff] 0.0
            %534 = vst [vmem:[#allocation5 + $0x10] sm:$0xff] 0.0
            %535 = vst [vmem:[#allocation5 + $0x18] sm:$0xff] 0.0
            %536 = vst [vmem:[#allocation5 + $0x20] sm:$0xff] 0.0
            %537 = vst [vmem:[#allocation5 + $0x28] sm:$0xff] 0.0
            %538 = vst [vmem:[#allocation5 + $0x30] sm:$0xff] 0.0
            %539 = vst [vmem:[#allocation5 + $0x38] sm:$0xff] 0.0
            %540 = vst [vmem:[#allocation5 + $0x40] sm:$0xff] 0.0
            %541 = vst [vmem:[#allocation5 + $0x48] sm:$0xff] 0.0
            %542 = vst [vmem:[#allocation5 + $0x50] sm:$0xff] 0.0
            %543 = vst [vmem:[#allocation5 + $0x58] sm:$0xff] 0.0
            %544 = vst [vmem:[#allocation5 + $0x60] sm:$0xff] 0.0
            %545 = vst [vmem:[#allocation5 + $0x68] sm:$0xff] 0.0
            %546 = vst [vmem:[#allocation5 + $0x70] sm:$0xff] 0.0
            %547 = vst [vmem:[#allocation5 + $0x78] sm:$0xff] 0.0
          $region62: #{tpu_custom_call.1} parent=57 // pred_fallthru
            _
          %v548 = vld [vmem:[#allocation5] sm:$0xff]
          %v549 = vld [vmem:[#allocation5 + $0x8] sm:$0xff]
          %v550 = vld [vmem:[#allocation5 + $0x10] sm:$0xff]
          %v551 = vld [vmem:[#allocation5 + $0x18] sm:$0xff]
          %v552 = vld [vmem:[#allocation5 + $0x20] sm:$0xff]
          %v553 = vld [vmem:[#allocation5 + $0x28] sm:$0xff]
          %v554 = vld [vmem:[#allocation5 + $0x30] sm:$0xff]
          %v555 = vld [vmem:[#allocation5 + $0x38] sm:$0xff]
          %v556 = vld [vmem:[#allocation5 + $0x40] sm:$0xff]
          %v557 = vld [vmem:[#allocation5 + $0x48] sm:$0xff]
          %v558 = vld [vmem:[#allocation5 + $0x50] sm:$0xff]
          %v559 = vld [vmem:[#allocation5 + $0x58] sm:$0xff]
          %v560 = vld [vmem:[#allocation5 + $0x60] sm:$0xff]
          %v561 = vld [vmem:[#allocation5 + $0x68] sm:$0xff]
          %v562 = vld [vmem:[#allocation5 + $0x70] sm:$0xff]
          %v563 = vld [vmem:[#allocation5 + $0x78] sm:$0xff]
          %s564 = sshra.s32 %s180, 4
          %s565 = sand.u32 %s180, 15
          %s566 = smul.addr %s564, 8
          %s567 = scalar_lea.vmem [#allocation3], %s566
          %v568 = vld [vmem:[%s567] sm:$0xff]
          %v569 = vld [vmem:[%s567 + $0x8] sm:$0xff]
          %v570 = vld [vmem:[%s567 + $0x10] sm:$0xff]
          %v571 = vld [vmem:[%s567 + $0x18] sm:$0xff]
          %v572 = vld [vmem:[%s567 + $0x20] sm:$0xff]
          %v573 = vld [vmem:[%s567 + $0x28] sm:$0xff]
          %v574 = vld [vmem:[%s567 + $0x30] sm:$0xff]
          %v575 = vld [vmem:[%s567 + $0x38] sm:$0xff]
          %v592 = vunpack.c.l.b16 %v181
          %v593 = vunpack.c.l.b16 %v182
          %v594 = vunpack.c.l.b16 %v183
          %v595 = vunpack.c.l.b16 %v184
          %v596 = vunpack.c.l.b16 %v185
          %v597 = vunpack.c.l.b16 %v186
          %v598 = vunpack.c.l.b16 %v187
          %v599 = vunpack.c.l.b16 %v188
          %v600 = vunpack.c.l.b16 %v189
          %v601 = vunpack.c.l.b16 %v190
          %v602 = vunpack.c.l.b16 %v191
          %v603 = vunpack.c.l.b16 %v192
          %v604 = vunpack.c.l.b16 %v193
          %v605 = vunpack.c.l.b16 %v194
          %v606 = vunpack.c.l.b16 %v195
          %v607 = vunpack.c.l.b16 %v196
          %v608 = vpack.c.b16 %v593, %v592
          %v609 = vpack.c.b16 %v595, %v594
          %v610 = vpack.c.b16 %v597, %v596
          %v611 = vpack.c.b16 %v599, %v598
          %v612 = vpack.c.b16 %v601, %v600
          %v613 = vpack.c.b16 %v603, %v602
          %v614 = vpack.c.b16 %v605, %v604
          %v615 = vpack.c.b16 %v607, %v606
          %624 = vmatprep.subr.bf16.mxu0 0
          %625 = vmatpush1.bf16.msra.mxu0 %v568
          %626 = vmatprep.subr.bf16.mxu0 0
          %627 = vmatpush1.bf16.msra.mxu0 %v569
          %628 = vmatprep.subr.bf16.mxu0 0
          %629 = vmatpush1.bf16.msra.mxu0 %v570
          %630 = vmatprep.subr.bf16.mxu0 0
          %631 = vmatpush1.bf16.msra.mxu0 %v571
          %632 = vmatprep.subr.bf16.mxu0 0
          %633 = vmatpush1.bf16.msra.mxu0 %v572
          %634 = vmatprep.subr.bf16.mxu0 0
          %635 = vmatpush1.bf16.msra.mxu0 %v573
          %636 = vmatprep.subr.bf16.mxu0 0
          %637 = vmatpush1.bf16.msra.mxu0 %v574
          %638 = vmatprep.subr.bf16.mxu0 0
          %639 = vmatpush1.bf16.msra.mxu0 %v575
          %640 = vmatprep.subr.bf16.mxu0 0
          %641 = vmatpush1.bf16.msra.mxu0 0
          %642 = vmatprep.subr.bf16.mxu0 0
          %643 = vmatpush1.bf16.msra.mxu0 0
          %644 = vmatprep.subr.bf16.mxu0 0
          %645 = vmatpush1.bf16.msra.mxu0 0
          %646 = vmatprep.subr.bf16.mxu0 0
          %647 = vmatpush1.bf16.msra.mxu0 0
          %648 = vmatprep.subr.bf16.mxu0 0
          %649 = vmatpush1.bf16.msra.mxu0 0
          %650 = vmatprep.subr.bf16.mxu0 0
          %651 = vmatpush1.bf16.msra.mxu0 0
          %652 = vmatprep.subr.bf16.mxu0 0
          %653 = vmatpush1.bf16.msra.mxu0 0
          %654 = vmatprep.subr.bf16.mxu0 0
          %655 = vmatpush1.bf16.msra.mxu0 0
          %656 = vmatprep.mubr.bf16.mxu0 0
          %657 = vmatmul.mubr.bf16.gmra.mrb[0].mxu0 %v608
          %v658 = vpop.f32.mrb[0].mxu0
          %v659 = vadd.f32 0.0, %v658
          %v660 = vpop.f32.mrb[0].mxu0
          %v661 = vpop.f32.mrb[0].mxu0
          %v662 = vadd.f32 0.0, %v661
          %v663 = vpop.f32.mrb[0].mxu0
          %664 = vmatprep.mubr.bf16.mxu0 0
          %665 = vmatmul.mubr.bf16.gmra.mrb[0].mxu0 %v609
          %v666 = vpop.f32.mrb[0].mxu0
          %v667 = vadd.f32 0.0, %v666
          %v668 = vpop.f32.mrb[0].mxu0
          %v669 = vpop.f32.mrb[0].mxu0
          %v670 = vadd.f32 0.0, %v669
          %v671 = vpop.f32.mrb[0].mxu0
          %672 = vmatprep.mubr.bf16.mxu0 0
          %673 = vmatmul.mubr.bf16.gmra.mrb[0].mxu0 %v610
          %v674 = vpop.f32.mrb[0].mxu0
          %v675 = vadd.f32 0.0, %v674
          %v676 = vpop.f32.mrb[0].mxu0
          %v677 = vpop.f32.mrb[0].mxu0
          %v678 = vadd.f32 0.0, %v677
          %v679 = vpop.f32.mrb[0].mxu0
          %680 = vmatprep.mubr.bf16.mxu0 0
          %681 = vmatmul.mubr.bf16.gmra.mrb[0].mxu0 %v611
          %v682 = vpop.f32.mrb[0].mxu0
          %v683 = vadd.f32 0.0, %v682
          %v684 = vpop.f32.mrb[0].mxu0
          %v685 = vpop.f32.mrb[0].mxu0
          %v686 = vadd.f32 0.0, %v685
          %v687 = vpop.f32.mrb[0].mxu0
          %688 = vmatprep.mubr.bf16.mxu0 0
          %689 = vmatmul.mubr.bf16.gmra.mrb[0].mxu0 %v612
          %v690 = vpop.f32.mrb[0].mxu0
          %v691 = vadd.f32 0.0, %v690
          %v692 = vpop.f32.mrb[0].mxu0
          %v693 = vpop.f32.mrb[0].mxu0
          %v694 = vadd.f32 0.0, %v693
          %v695 = vpop.f32.mrb[0].mxu0
          %696 = vmatprep.mubr.bf16.mxu0 0
          %697 = vmatmul.mubr.bf16.gmra.mrb[0].mxu0 %v613
          %v698 = vpop.f32.mrb[0].mxu0
          %v699 = vadd.f32 0.0, %v698
          %v700 = vpop.f32.mrb[0].mxu0
          %v701 = vpop.f32.mrb[0].mxu0
          %v702 = vadd.f32 0.0, %v701
          %v703 = vpop.f32.mrb[0].mxu0
          %704 = vmatprep.mubr.bf16.mxu0 0
          %705 = vmatmul.mubr.bf16.gmra.mrb[0].mxu0 %v614
          %v706 = vpop.f32.mrb[0].mxu0
          %v707 = vadd.f32 0.0, %v706
          %v708 = vpop.f32.mrb[0].mxu0
          %v709 = vpop.f32.mrb[0].mxu0
          %v710 = vadd.f32 0.0, %v709
          %v711 = vpop.f32.mrb[0].mxu0
          %712 = vmatprep.mubr.bf16.mxu0 0
          %713 = vmatmul.mubr.bf16.gmra.mrb[0].mxu0 %v615
          %v714 = vpop.f32.mrb[0].mxu0
          %v715 = vadd.f32 0.0, %v714
          %v716 = vpop.f32.mrb[0].mxu0
          %v717 = vpop.f32.mrb[0].mxu0
          %v718 = vadd.f32 0.0, %v717
          %v719 = vpop.f32.mrb[0].mxu0
          %720 = vdwg.mxu0
          %v721 = vadd.f32 %v548, %v659
          %v722 = vadd.f32 %v549, %v662
          %v723 = vadd.f32 %v550, %v667
          %v724 = vadd.f32 %v551, %v670
          %v725 = vadd.f32 %v552, %v675
          %v726 = vadd.f32 %v553, %v678
          %v727 = vadd.f32 %v554, %v683
          %v728 = vadd.f32 %v555, %v686
          %v729 = vadd.f32 %v556, %v691
          %v730 = vadd.f32 %v557, %v694
          %v731 = vadd.f32 %v558, %v699
          %v732 = vadd.f32 %v559, %v702
          %v733 = vadd.f32 %v560, %v707
          %v734 = vadd.f32 %v561, %v710
          %v735 = vadd.f32 %v562, %v715
          %v736 = vadd.f32 %v563, %v718
          %737 = vst [vmem:[#allocation5] sm:$0xff] %v721
          %738 = vst [vmem:[#allocation5 + $0x8] sm:$0xff] %v722
          %739 = vst [vmem:[#allocation5 + $0x10] sm:$0xff] %v723
          %740 = vst [vmem:[#allocation5 + $0x18] sm:$0xff] %v724
          %741 = vst [vmem:[#allocation5 + $0x20] sm:$0xff] %v725
          %742 = vst [vmem:[#allocation5 + $0x28] sm:$0xff] %v726
          %743 = vst [vmem:[#allocation5 + $0x30] sm:$0xff] %v727
          %744 = vst [vmem:[#allocation5 + $0x38] sm:$0xff] %v728
          %745 = vst [vmem:[#allocation5 + $0x40] sm:$0xff] %v729
          %746 = vst [vmem:[#allocation5 + $0x48] sm:$0xff] %v730
          %747 = vst [vmem:[#allocation5 + $0x50] sm:$0xff] %v731
          %748 = vst [vmem:[#allocation5 + $0x58] sm:$0xff] %v732
          %749 = vst [vmem:[#allocation5 + $0x60] sm:$0xff] %v733
          %750 = vst [vmem:[#allocation5 + $0x68] sm:$0xff] %v734
          %751 = vst [vmem:[#allocation5 + $0x70] sm:$0xff] %v735
          %752 = vst [vmem:[#allocation5 + $0x78] sm:$0xff] %v736
          // Predicated region
          $region63: #{tpu_custom_call.1} parent=57 // pred_check
            %p753 = pneg %p143
          $region64: #{tpu_custom_call.1} parent=57 // pred_check_branch
            %755 = sbr.rel (%p753) target = $region66
          $region65: #{tpu_custom_call.1} parent=57 // pred_region
            %v756 = vld [vmem:[#allocation5] sm:$0xff]
            %v757 = vld [vmem:[#allocation5 + $0x8] sm:$0xff]
            %v758 = vld [vmem:[#allocation5 + $0x10] sm:$0xff]
            %v759 = vld [vmem:[#allocation5 + $0x18] sm:$0xff]
            %v760 = vld [vmem:[#allocation5 + $0x20] sm:$0xff]
            %v761 = vld [vmem:[#allocation5 + $0x28] sm:$0xff]
            %v762 = vld [vmem:[#allocation5 + $0x30] sm:$0xff]
            %v763 = vld [vmem:[#allocation5 + $0x38] sm:$0xff]
            %v764 = vld [vmem:[#allocation5 + $0x40] sm:$0xff]
            %v765 = vld [vmem:[#allocation5 + $0x48] sm:$0xff]
            %v766 = vld [vmem:[#allocation5 + $0x50] sm:$0xff]
            %v767 = vld [vmem:[#allocation5 + $0x58] sm:$0xff]
            %v768 = vld [vmem:[#allocation5 + $0x60] sm:$0xff]
            %v769 = vld [vmem:[#allocation5 + $0x68] sm:$0xff]
            %v770 = vld [vmem:[#allocation5 + $0x70] sm:$0xff]
            %v771 = vld [vmem:[#allocation5 + $0x78] sm:$0xff]
            %s772 = scalar_lea.vmem [#allocation4], %s179
            %v773 = vld [vmem:[%s772] sm:$0xff]
            %v774 = vld [vmem:[%s772 + $0x8] sm:$0xff]
            %v775 = vld [vmem:[%s772 + $0x10] sm:$0xff]
            %v776 = vld [vmem:[%s772 + $0x18] sm:$0xff]
            %v777 = vld [vmem:[%s772 + $0x20] sm:$0xff]
            %v778 = vld [vmem:[%s772 + $0x28] sm:$0xff]
            %v779 = vld [vmem:[%s772 + $0x30] sm:$0xff]
            %v780 = vld [vmem:[%s772 + $0x38] sm:$0xff]
            %v781 = vld [vmem:[%s772 + $0x40] sm:$0xff]
            %v782 = vld [vmem:[%s772 + $0x48] sm:$0xff]
            %v783 = vld [vmem:[%s772 + $0x50] sm:$0xff]
            %v784 = vld [vmem:[%s772 + $0x58] sm:$0xff]
            %v785 = vld [vmem:[%s772 + $0x60] sm:$0xff]
            %v786 = vld [vmem:[%s772 + $0x68] sm:$0xff]
            %v787 = vld [vmem:[%s772 + $0x70] sm:$0xff]
            %v788 = vld [vmem:[%s772 + $0x78] sm:$0xff]
            %v789 = vadd.f32 %v773, %v756
            %v790 = vadd.f32 %v774, %v757
            %v791 = vadd.f32 %v775, %v758
            %v792 = vadd.f32 %v776, %v759
            %v793 = vadd.f32 %v777, %v760
            %v794 = vadd.f32 %v778, %v761
            %v795 = vadd.f32 %v779, %v762
            %v796 = vadd.f32 %v780, %v763
            %v797 = vadd.f32 %v781, %v764
            %v798 = vadd.f32 %v782, %v765
            %v799 = vadd.f32 %v783, %v766
            %v800 = vadd.f32 %v784, %v767
            %v801 = vadd.f32 %v785, %v768
            %v802 = vadd.f32 %v786, %v769
            %v803 = vadd.f32 %v787, %v770
            %v804 = vadd.f32 %v788, %v771
            %805 = vst [vmem:[%s772] sm:$0xff] %v789
            %806 = vst [vmem:[%s772 + $0x8] sm:$0xff] %v790
            %807 = vst [vmem:[%s772 + $0x10] sm:$0xff] %v791
            %808 = vst [vmem:[%s772 + $0x18] sm:$0xff] %v792
            %809 = vst [vmem:[%s772 + $0x20] sm:$0xff] %v793
            %810 = vst [vmem:[%s772 + $0x28] sm:$0xff] %v794
            %811 = vst [vmem:[%s772 + $0x30] sm:$0xff] %v795
            %812 = vst [vmem:[%s772 + $0x38] sm:$0xff] %v796
            %813 = vst [vmem:[%s772 + $0x40] sm:$0xff] %v797
            %814 = vst [vmem:[%s772 + $0x48] sm:$0xff] %v798
            %815 = vst [vmem:[%s772 + $0x50] sm:$0xff] %v799
            %816 = vst [vmem:[%s772 + $0x58] sm:$0xff] %v800
            %817 = vst [vmem:[%s772 + $0x60] sm:$0xff] %v801
            %818 = vst [vmem:[%s772 + $0x68] sm:$0xff] %v802
            %819 = vst [vmem:[%s772 + $0x70] sm:$0xff] %v803
            %820 = vst [vmem:[%s772 + $0x78] sm:$0xff] %v804
            %v821 = vpack.c.bf16 %v757, %v756
            %v822 = vpack.c.bf16 %v759, %v758
            %v823 = vpack.c.bf16 %v761, %v760
            %v824 = vpack.c.bf16 %v763, %v762
            %v825 = vpack.c.bf16 %v765, %v764
            %v826 = vpack.c.bf16 %v767, %v766
            %v827 = vpack.c.bf16 %v769, %v768
            %v828 = vpack.c.bf16 %v771, %v770
            %s829 = sshra.s32 %s179, 4
            %s830 = sand.u32 %s179, 15
            %s831 = smul.addr %s829, 8
            %s832 = scalar_lea.vmem [#allocation2], %s831
            %833 = vst [vmem:[%s832] sm:$0xff] %v821
            %834 = vst [vmem:[%s832 + $0x8] sm:$0xff] %v822
            %835 = vst [vmem:[%s832 + $0x10] sm:$0xff] %v823
            %836 = vst [vmem:[%s832 + $0x18] sm:$0xff] %v824
            %837 = vst [vmem:[%s832 + $0x20] sm:$0xff] %v825
            %838 = vst [vmem:[%s832 + $0x28] sm:$0xff] %v826
            %839 = vst [vmem:[%s832 + $0x30] sm:$0xff] %v827
            %840 = vst [vmem:[%s832 + $0x38] sm:$0xff] %v828
          $region66: #{tpu_custom_call.1} parent=57 // pred_fallthru
            _
        $region58: #{tpu_custom_call.1} parent=23 // pred_fallthru
          _
        %p841 = scmp.eq.s32.totalorder %s30, 1
        %p842 = pnand %p841, %p145
        %p843 = pneg %p842
        // Predicated region
        $region67: #{tpu_custom_call.1} parent=23 // pred_check
          _
        $region68: #{tpu_custom_call.1} parent=23 // pred_check_branch
          %845 = sbr.rel (%p842) target = $region70
        $region69: #{tpu_custom_call.1} parent=23 // pred_region
          %846 = vst [vmem:[#allocation6] sm:$0xff] 0.0
          %847 = vst [vmem:[#allocation7] sm:$0xff] 0.0
          loop: start=0, step=1, limit=8
          $region71: #{tpu_custom_call.1} parent=69 // loop_pre_header
            _
          $region72: #{tpu_custom_call.1} parent=69 // loop_header
            %s849 = sphi 0, %s853
            %p850 = scmp.ge.s32.totalorder %s849, 8
          $region73: #{tpu_custom_call.1} parent=69 // loop_header_branch
            %852 = sbr.rel (%p850) target = $region77
          $region74: #{tpu_custom_call.1} parent=69 // loop_body
            %s854 = sld [smem:[#allocation9 + %s849]]
            %s855 = sld [smem:[#allocation10 + %s849]]
            %s856 = sadd.s32 %s855, 24
            %s857 = scalar_lea.vmem [#allocation4], %s854
            %v858 = vld [vmem:[%s857] sm:$0x1]
            %s859 = scalar_lea.vmem [#allocation6], %s849
            %860 = vst [vmem:[%s859] sm:$0x1] %v858
            %s861 = scalar_lea.vmem [#allocation4], %s856
            %v862 = vld [vmem:[%s861] sm:$0x1]
            %s863 = scalar_lea.vmem [#allocation7], %s849
            %864 = vst [vmem:[%s863] sm:$0x1] %v862
          $region75: #{tpu_custom_call.1} parent=69 // loop_footer
            %s853 = sadd.s32 1, %s849
          $region76: #{tpu_custom_call.1} parent=69 // loop_footer_branch
            %848 = sbr.rel target = $region72
          $region77: #{tpu_custom_call.1} parent=69 // loop_exit
            _
          %v865 = vld [vmem:[#allocation6] sm:$0xff]
          %v866 = vld [vmem:[#allocation7] sm:$0xff]
          %v867 = vmul.f32 %v865, %v866
          %868 = vadd.xlane.f32.xlu0 %v867
          %v869 = vpop.xlane.xlu0 %868
          %v870 = vmul.f32 %v869, 0.11111111
          %vm871 = vcmask 7168
          %872 = vst.msk [vmem:[%s5] sm:$0xff] %vm871, %v870
        $region70: #{tpu_custom_call.1} parent=23 // pred_fallthru
          _
        // Predicated region
        $region78: #{tpu_custom_call.1} parent=23 // pred_check
          %p873 = pneg %p85
        $region79: #{tpu_custom_call.1} parent=23 // pred_check_branch
          %875 = sbr.rel (%p873) target = $region81
        $region80: #{tpu_custom_call.1} parent=23 // pred_region
          _
        $region81: #{tpu_custom_call.1} parent=23 // pred_fallthru
          _
        // Predicated region
        $region82: #{tpu_custom_call.1} parent=23 // pred_check
          %p876 = pneg %p85
        $region83: #{tpu_custom_call.1} parent=23 // pred_check_branch
          %878 = sbr.rel (%p876) target = $region85
        $region84: #{tpu_custom_call.1} parent=23 // pred_region
          _
        $region85: #{tpu_custom_call.1} parent=23 // pred_fallthru
          _
      $region24: #{tpu_custom_call.1} parent=5 // pred_fallthru
        _
      %p879 = scmp.le.s32.totalorder 2, %s20
      // Predicated region
      $region86: #{tpu_custom_call.1} parent=5 // pred_check
        %p880 = pneg %p879
      $region87: #{tpu_custom_call.1} parent=5 // pred_check_branch
        %882 = sbr.rel (%p880) target = $region89
      $region88: #{tpu_custom_call.1} parent=5 // pred_region
        %s883 = ssub.s32 %s20, 2
      $region89: #{tpu_custom_call.1} parent=5 // pred_fallthru
        _
    $region6: #{tpu_custom_call.1} parent=1 // loop_footer
      %s24 = sadd.s32 1, %s20
    $region7: #{tpu_custom_call.1} parent=1 // loop_footer_branch
      %19 = sbr.rel target = $region3
    $region8: #{tpu_custom_call.1} parent=1 // loop_exit
      _
    %884 = vsyncpa [#allocation12], 1
    %s885 = scalar_lea.sflag [#allocation12], 1
    %886 = vsyncpa %s885, 1

</llo_original>
